<compile_context>
chip_gen: v7x
topology: tpu7x:2x2x1
jax: 0.10.0
libtpu: 0.0.40
codegen_flags: <defaults>
</compile_context>

<pallas_src>
import jax
import jax.numpy as jnp
from jax import lax
from jax.experimental import pallas as pl
from jax.experimental.pallas import tpu as pltpu


_LANE = 128
_MIB = 1024 * 1024
# Conservative usable-VMEM budget that is portable to v7x (64 MiB / TC, leave
# headroom for compiler-internal scratch).  Always safe on v5e/v6e (128 MiB).
_VMEM_BUDGET = 48 * _MIB
_VMEM_HEADROOM = 16 * _MIB
_VMEM_LIMIT_CAP = 56 * _MIB


def _round_up(x: int, m: int) -> int:
    return ((x + m - 1) // m) * m


def _itemsize(dtype) -> int:
    return jnp.dtype(dtype).itemsize


def _pick_tile(sp: int, fits) -> int:
    """Largest row tile in {512, 384, 256, 128} that divides sp and fits VMEM."""
    for cand in (512, 384, 256, 128):
        if sp % cand == 0 and fits(cand):
            return cand
    raise ValueError(
        "probe_forward: no row tile <= 512 fits the 48 MiB VMEM budget for "
        "these shapes; reduce dim_in / seq_len or add K-tiling.")


def _project_kernel(x_ref, w_ref, t_ref, sq_ref):
    # x_ref:  (1, TP, D_in)  row tile of one batch element
    # w_ref:  (D_in, Dp)     whole projection matrix, resident in VMEM
    # t_ref:  (1, TP, Dp)    projected rows (compute dtype)
    # sq_ref: (1, 1, TP)     lane-dense squared norms ||t_i||^2 (f32)
    x = x_ref[0]                                                       # (TP, D_in)
    t32 = jnp.dot(x, w_ref[...], preferred_element_type=jnp.float32)  # (TP, Dp)
    t_ref[0] = t32.astype(t_ref.dtype)
    # depth(): produce ||t_i||^2 lane-dense as (1, TP) via a 1xDp matmul
    # (avoids a sublane->lane relayout and masked 1-lane stores).
    tsq = t32 * t32
    ones = jnp.ones((1, tsq.shape[-1]), jnp.float32)
    sq_ref[0] = lax.dot_general(ones, tsq, (((1,), (1,)), ((), ())),
                                preferred_element_type=jnp.float32)    # (1, TP)


def _distance_kernel(t_rows_ref, t_full_ref, sq_ref, dist_ref):
    # t_rows_ref: (1, TQ, Dp)  rows of this distance tile
    # t_full_ref: (1, Sp, Dp)  full projected batch element (re-DMA'd per b)
    # sq_ref:     (1, 1, Sp)   lane-dense squared norms
    # dist_ref:   (1, TQ, Sp)  one row-tile of the pairwise squared distances
    tq = t_rows_ref.shape[1]
    t_rows = t_rows_ref[0]                                             # (TQ, Dp)
    t_full = t_full_ref[0]                                             # (Sp, Dp)
    sq_lane = sq_ref[0]                                                # (1, Sp)

    tr32 = t_rows.astype(jnp.float32)
    sq_rows = jnp.sum(tr32 * tr32, axis=-1, keepdims=True)             # (TQ, 1)

    # ||t_i - t_j||^2 = ||t_i||^2 + ||t_j||^2 - 2 <t_i, t_j>
    # Fold -2 into the small row operand; contract on Dp directly (transposed
    # RHS is MXU-native, no t.T materialization).  In the bf16 path both
    # operands stay bf16 with f32 accumulation.
    lhs = t_rows * jnp.asarray(-2.0, t_rows.dtype)
    gram_n2 = lax.dot_general(lhs, t_full, (((1,), (1,)), ((), ())),
                              preferred_element_type=jnp.float32)      # (TQ, Sp)
    dist = sq_rows + (sq_lane + gram_n2)

    # Clamp cancellation negatives; force the diagonal to exactly zero
    # (the exact (ti - tj)^2 form is nonnegative with a zero diagonal).
    row0 = pl.program_id(1) * tq
    rows = row0 + lax.broadcasted_iota(jnp.int32, dist.shape, 0)
    cols = lax.broadcasted_iota(jnp.int32, dist.shape, 1)
    dist_ref[0] = jnp.where(rows == cols, 0.0, jnp.maximum(dist, 0.0))


def probe_forward(batch, proj, task: str = "both", *, use_bf16: bool = False):
    """batch: (B, S, dim_in); proj: (dim_in, dim_out)."""
    if task not in ("distance", "depth", "both"):
        raise ValueError(f"unknown task: {task}")

    batch = jnp.asarray(batch, jnp.float32)
    proj = jnp.asarray(proj, jnp.float32)
    B, S, D_in = batch.shape
    D_out = proj.shape[1]

    # Pad seq-len and probe rank to full lane width: all stores become
    # unmasked lane-dense stores and all matmuls use full MXU lanes.  Zero
    # padding leaves ||t||^2 and the gram for real rows unchanged.
    Sp = _round_up(S, _LANE)
    Dp = _round_up(D_out, _LANE)
    if Sp != S:
        batch = jnp.pad(batch, ((0, 0), (0, Sp - S), (0, 0)))
    if Dp != D_out:
        proj = jnp.pad(proj, ((0, 0), (0, Dp - D_out)))

    compute_dtype = jnp.bfloat16 if use_bf16 else jnp.float32
    x = batch.astype(compute_dtype)
    w = proj.astype(compute_dtype)
    c_isz = _itemsize(compute_dtype)

    # ----------------- kernel A: projection + lane-dense ||t||^2 -----------------
    def _proj_vmem(tp):
        return (2 * tp * D_in * c_isz      # x row tile (double-buffered)
                + D_in * Dp * c_isz        # W, whole array, single buffer
                + 2 * tp * Dp * c_isz      # t out tile (double-buffered)
                + 2 * tp * 4)              # sq out tile
    tp = _pick_tile(Sp, lambda t: _proj_vmem(t) <= _VMEM_BUDGET)
    proj_vmem = _proj_vmem(tp)
    if proj_vmem > _VMEM_BUDGET:
        raise ValueError("projection kernel exceeds VMEM budget")

    t, sq = pl.pallas_call(
        _project_kernel,
        out_shape=(
            jax.ShapeDtypeStruct((B, Sp, Dp), compute_dtype),
            jax.ShapeDtypeStruct((B, 1, Sp), jnp.float32),
        ),
        grid_spec=pltpu.PrefetchScalarGridSpec(
            num_scalar_prefetch=0,
            grid=(B, Sp // tp),
            in_specs=[
                pl.BlockSpec((1, tp, D_in), lambda b, p: (b, p, 0)),
                # grid-invariant weight: whole array resident in VMEM
                pl.BlockSpec(memory_space=pltpu.MemorySpace.VMEM),
            ],
            out_specs=[
                pl.BlockSpec((1, tp, Dp), lambda b, p: (b, p, 0)),
                pl.BlockSpec((1, 1, tp), lambda b, p: (b, 0, p)),
            ],
        ),
        compiler_params=pltpu.CompilerParams(
            dimension_semantics=("parallel", "parallel"),
            vmem_limit_bytes=min(proj_vmem + _VMEM_HEADROOM, _VMEM_LIMIT_CAP),
        ),
    )(x, w)

    depth = sq.reshape(B, Sp)[:, :S]
    if task == "depth":
        return depth

    # ----------------- kernel B: row-tiled pairwise squared distances ------------
    def _dist_vmem(tq):
        return (2 * tq * Dp * c_isz        # t row tile
                + 2 * Sp * Dp * c_isz      # full t of one batch element
                + 2 * Sp * 4               # sq lane vector
                + 2 * tq * Sp * 4)         # dist out tile
    tq = _pick_tile(Sp, lambda t: _dist_vmem(t) <= _VMEM_BUDGET)
    dist_vmem = _dist_vmem(tq)
    if dist_vmem > _VMEM_BUDGET:
        raise ValueError("distance kernel exceeds VMEM budget")

    dist = pl.pallas_call(
        _distance_kernel,
        out_shape=jax.ShapeDtypeStruct((B, Sp, Sp), jnp.float32),
        grid_spec=pltpu.PrefetchScalarGridSpec(
            num_scalar_prefetch=0,
            grid=(B, Sp // tq),
            in_specs=[
                pl.BlockSpec((1, tq, Dp), lambda b, q: (b, q, 0)),
                pl.BlockSpec((1, Sp, Dp), lambda b, q: (b, 0, 0)),
                pl.BlockSpec((1, 1, Sp), lambda b, q: (b, 0, 0)),
            ],
            out_specs=pl.BlockSpec((1, tq, Sp), lambda b, q: (b, q, 0)),
        ),
        compiler_params=pltpu.CompilerParams(
            # no cross-tile carry anywhere -> both axes parallel (megacore
            # can shard the row-tile axis on v7x even for B == 1).
            dimension_semantics=("parallel", "parallel"),
            vmem_limit_bytes=min(dist_vmem + _VMEM_HEADROOM, _VMEM_LIMIT_CAP),
        ),
    )(t, t, sq)

    dist = dist[:, :S, :S]

    if task == "distance":
        return dist
    return (dist, depth)


def _reference(batch, proj):
    t = jnp.einsum("bsd,de->bse", batch, proj)
    diffs = t[:, :, None, :] - t[:, None, :, :]
    dist = jnp.sum(diffs * diffs, axis=-1)
    depth = jnp.sum(t * t, axis=-1)
    return dist, depth


if __name__ == "__main__":
    B, S, D_IN, D_OUT = 2, 8, 32, 16

    key = jax.random.PRNGKey(0)
    k_x, k_w = jax.random.split(key)
    batch = jax.random.normal(k_x, (B, S, D_IN), dtype=jnp.float32)
    # deterministic parameter init (stand-in for the probe's learned projection)
    proj = jax.random.uniform(k_w, (D_IN, D_OUT), dtype=jnp.float32,
                              minval=-0.05, maxval=0.05)

    dist, depth = probe_forward(batch, proj, task="both")
    jax.block_until_ready((dist, depth))

    # sanity check against pure-JAX reference
    dist_ref, depth_ref = _reference(batch, proj)
    assert dist.shape == (B, S, S) and depth.shape == (B, S)
    assert jnp.allclose(dist, dist_ref, atol=1e-4, rtol=1e-4)
    assert jnp.allclose(depth, depth_ref, atol=1e-4, rtol=1e-4)

    print("KERNEL_OK")
</pallas_src>

<mosaic_0001>
module attributes {stable_mosaic.version = 11 : i64} {
  func.func @_project_kernel(%arg0: i32, %arg1: i32, %arg2: memref<1x128x32xf32, #tpu.memory_space<vmem>>, %arg3: memref<32x128xf32, #tpu.memory_space<vmem>>, %arg4: memref<1x128x128xf32, #tpu.memory_space<vmem>>, %arg5: memref<1x1x128xf32, #tpu.memory_space<vmem>>) attributes {dimension_semantics = [#tpu.dimension_semantics<parallel>, #tpu.dimension_semantics<parallel>], iteration_bounds = array<i64: 2, 1>, scalar_prefetch = 0 : i64, scratch_operands = 0 : i64, tpu.core_type = #tpu.core_type<tc>, window_params = [{transform_indices = @transform_0, window_bounds = array<i64: 1, 128, 32>}, {pipeline_mode = #tpu.pipeline_mode<synchronous>, transform_indices = @transform_1, window_bounds = array<i64: 32, 128>}, {transform_indices = @transform_2, window_bounds = array<i64: 1, 128, 128>}, {transform_indices = @transform_3, window_bounds = array<i64: 1, 1, 128>}]} {
    %c0 = arith.constant 0 : index
    %c0_0 = arith.constant 0 : index
    %c0_1 = arith.constant 0 : index
    %0 = vector.load %arg2[%c0, %c0_0, %c0_1] : memref<1x128x32xf32, #tpu.memory_space<vmem>>, vector<1x128x32xf32>
    %1 = vector.shape_cast %0 : vector<1x128x32xf32> to vector<128x32xf32>
    %c0_2 = arith.constant 0 : index
    %c0_3 = arith.constant 0 : index
    %2 = vector.load %arg3[%c0_2, %c0_3] : memref<32x128xf32, #tpu.memory_space<vmem>>, vector<32x128xf32>
    %cst = arith.constant dense<0.000000e+00> : vector<128x128xf32>
    %3 = tpu.matmul %1, %2, %cst {dimension_numbers = #tpu.dot_dimension_numbers<[1], [0], [0], [1], [0, 0, 1, 1], [], []>} : vector<128x32xf32>, vector<32x128xf32>, vector<128x128xf32> -> vector<128x128xf32>
    %c0_4 = arith.constant 0 : index
    %c0_5 = arith.constant 0 : index
    %c0_6 = arith.constant 0 : index
    %4 = vector.load %arg4[%c0_4, %c0_5, %c0_6] : memref<1x128x128xf32, #tpu.memory_space<vmem>>, vector<1x128x128xf32>
    %5 = vector.shape_cast %4 : vector<1x128x128xf32> to vector<128x128xf32>
    %6 = vector.shape_cast %3 : vector<128x128xf32> to vector<1x128x128xf32>
    tpu.vector_store %arg4[%c0_4, %c0_5, %c0_6], %6 {strides = array<i32>} : memref<1x128x128xf32, #tpu.memory_space<vmem>>, vector<1x128x128xf32>,
    %7 = arith.mulf %3, %3 : vector<128x128xf32>
    %cst_7 = arith.constant 1.000000e+00 : f32
    %8 = vector.broadcast %cst_7 : f32 to vector<1x128xf32>
    %cst_8 = arith.constant dense<0.000000e+00> : vector<1x128xf32>
    %9 = tpu.matmul %8, %7, %cst_8 {dimension_numbers = #tpu.dot_dimension_numbers<[1], [1], [0], [0], [0, 0, 1, 0], [], []>} : vector<1x128xf32>, vector<128x128xf32>, vector<1x128xf32> -> vector<1x128xf32>
    %c0_9 = arith.constant 0 : index
    %c0_10 = arith.constant 0 : index
    %c0_11 = arith.constant 0 : index
    %10 = vector.load %arg5[%c0_9, %c0_10, %c0_11] : memref<1x1x128xf32, #tpu.memory_space<vmem>>, vector<1x1x128xf32>
    %11 = vector.shape_cast %10 : vector<1x1x128xf32> to vector<1x128xf32>
    %12 = vector.shape_cast %9 : vector<1x128xf32> to vector<1x1x128xf32>
    tpu.vector_store %arg5[%c0_9, %c0_10, %c0_11], %12 {strides = array<i32>} : memref<1x1x128xf32, #tpu.memory_space<vmem>>, vector<1x1x128xf32>,
    return
  }
  func.func @transform_0(%arg0: i32, %arg1: i32) -> (i32, i32, i32) {
    %c0_i32 = arith.constant 0 : i32
    %c0_i32_0 = arith.constant 0 : i32
    return %arg0, %arg1, %c0_i32 : i32, i32, i32
  }
  func.func @transform_1(%arg0: i32, %arg1: i32) -> (i32, i32) {
    %c0_i32 = arith.constant 0 : i32
    %c0_i32_0 = arith.constant 0 : i32
    %c0_i32_1 = arith.constant 0 : i32
    return %c0_i32, %c0_i32_0 : i32, i32
  }
  func.func @transform_2(%arg0: i32, %arg1: i32) -> (i32, i32, i32) {
    %c0_i32 = arith.constant 0 : i32
    %c0_i32_0 = arith.constant 0 : i32
    return %arg0, %arg1, %c0_i32 : i32, i32, i32
  }
  func.func @transform_3(%arg0: i32, %arg1: i32) -> (i32, i32, i32) {
    %c0_i32 = arith.constant 0 : i32
    %c0_i32_0 = arith.constant 0 : i32
    return %arg0, %c0_i32, %arg1 : i32, i32, i32
  }
}

</mosaic_0001>

<llo_original>
// kernel: tpu_custom_call.1
$region0: #{tpu_custom_call.1}
  #allocation0 [shape = 'u32[]', space=smem, size = 0x4, offset = 0x4, fixed_abs, tag = 'smem constant byte address 0x4 - core index']
  #allocation1 [shape = 'u32[144,128]{1,0:T(1,128)}', space=vmem, size = 0x12000, scoped, tag = 'internal scratch']
  %s0 = inlined_call_operand.vmem [shape: f32[2,128,32], index: 0, kind: input, shape index: {}]
  %s1 = inlined_call_operand.vmem [shape: f32[32,128], index: 1, kind: input, shape index: {}]
  %s2 = inlined_call_operand.hbm [shape: f32[2,128,128], index: 2, kind: output, shape index: {0}]
  %s3 = inlined_call_operand.hbm [shape: f32[2,1,128], index: 3, kind: output, shape index: {1}]
  %4 = xla_tuple %s2, %s3
  %s5 = sld [smem:[#allocation0]]
  $region49: #{tpu_custom_call.1} parent=0
    _
  %s7 = ssub.s32 1, %s5
  %s8 = scalar_select 0, %s7, %s5
  $region1: #{tpu_custom_call.1} parent=0
    #allocation2 [shape = 'u8[131072]{0}', space=vmem, size = 0x20000, scoped, tag = 'output window, operand 0']
    #allocation3 [shape = 's32[2]{0}', space=sflag, size = 0x8, scoped, tag = 'scoped memory for tpu_custom_call.1']
    #allocation4 [shape = 'u8[1024]{0}', space=vmem, size = 0x400, scoped, tag = 'output window, operand 1']
    #allocation5 [shape = 's32[2]{0}', space=sflag, size = 0x8, scoped, tag = 'scoped memory for tpu_custom_call.1']
    %9 = vsyncpa [#allocation3], 0
    %s10 = scalar_lea.sflag [#allocation3], 1
    %11 = vsyncpa %s10, 0
    %12 = vsyncpa [#allocation5], 0
    %s13 = scalar_lea.sflag [#allocation5], 1
    %14 = vsyncpa %s13, 0
    loop: start=0, step=1, limit=4
    $region2: #{tpu_custom_call.1} parent=1 // loop_pre_header
      _
    $region3: #{tpu_custom_call.1} parent=1 // loop_header
      %s16 = sphi 0, %s20
      %p17 = scmp.ge.s32.totalorder %s16, 4
      %s23 = sphi 0, %s35
      %s24 = sphi 0, %s31
      %s25 = sphi 0, %s23
      %s26 = sphi 0, %s24
      %s27 = sphi 0, %s25
      %s28 = sphi 0, %s26
      %s40 = sphi 0, %s42
      %s43 = sphi 0, %s40
      %s44 = sphi 0, %s43
      %s60 = sphi 0, %s44
      %s64 = sphi 0, %s64
      %s66 = sphi 0, %s64
      %s67 = sphi 0, %s66
      %s81 = sphi 0, %s67
      %s89 = sphi 0, %s91
      %s92 = sphi 0, %s89
      %s93 = sphi 0, %s92
      %s109 = sphi 0, %s93
      %s117 = sphi 0, %s119
      %s120 = sphi 0, %s117
      %s121 = sphi 0, %s120
      %s137 = sphi 0, %s121
    $region4: #{tpu_custom_call.1} parent=1 // loop_header_branch
      %19 = sbr.rel (%p17) target = $region8
    $region5: #{tpu_custom_call.1} parent=1 // loop_body
      %s21 = ssub.s32 %s16, 1
      %s22 = ssub.s32 %s16, 2
      %s29 = sadd.s32 1, %s24
      %p30 = scmp.ge.s32.totalorder %s29, 1
      %s31 = scalar_select %p30, 0, %s29
      %s32 = sadd.s32 1, %s23
      %s33 = scalar_select %p30, %s32, %s23
      %p34 = scmp.ge.s32.totalorder %s33, 2
      %s35 = scalar_select %p34, 0, %s33
      %s36 = ssub.s32 %s23, %s35
      %s37 = ssub.s32 %s24, %s31
      %s38 = sor.u32 %s36, %s37
      %p39 = scmp.eq.s32.totalorder %s38, 0
      %s41 = sadd.s32 %s40, 1
      %s42 = scalar_select %p39, %s40, %s41
      %p45 = pneg %p39
      %p46 = scmp.eq.s32.totalorder %s16, 1
      %p47 = por %p45, %p46
      %p48 = scmp.ne.s32.totalorder %s40, %s43
      %p49 = scmp.eq.s32.totalorder %s16, 0
      %p50 = por %p48, %p49
      %p51 = scmp.ne.s32.totalorder %s40, %s43
      %p52 = scmp.eq.s32.totalorder %s21, 1
      %p53 = por %p51, %p52
      %p54 = scmp.ne.s32.totalorder %s43, %s44
      %p55 = scmp.eq.s32.totalorder %s21, 0
      %p56 = por %p54, %p55
      %p57 = scmp.ne.s32.totalorder %s43, %s44
      %p58 = scmp.eq.s32.totalorder %s22, 1
      %p59 = por %p57, %p58
      %p61 = scmp.ne.s32.totalorder %s44, %s60
      %p62 = scmp.eq.s32.totalorder %s22, 0
      %p63 = por %p61, %p62
      %s65 = sadd.s32 %s64, 1
      %p68 = scmp.eq.s32.totalorder %s16, 1
      %p69 = scmp.ne.s32.totalorder %s64, %s66
      %p70 = scmp.eq.s32.totalorder %s16, 0
      %p71 = por %p69, %p70
      %p72 = scmp.ne.s32.totalorder %s64, %s66
      %p73 = scmp.eq.s32.totalorder %s21, 1
      %p74 = por %p72, %p73
      %p75 = scmp.ne.s32.totalorder %s66, %s67
      %p76 = scmp.eq.s32.totalorder %s21, 0
      %p77 = por %p75, %p76
      %p78 = scmp.ne.s32.totalorder %s66, %s67
      %p79 = scmp.eq.s32.totalorder %s22, 1
      %p80 = por %p78, %p79
      %p82 = scmp.ne.s32.totalorder %s67, %s81
      %p83 = scmp.eq.s32.totalorder %s22, 0
      %p84 = por %p82, %p83
      %s85 = ssub.s32 %s23, %s35
      %s86 = ssub.s32 %s24, %s31
      %s87 = sor.u32 %s85, %s86
      %p88 = scmp.eq.s32.totalorder %s87, 0
      %s90 = sadd.s32 %s89, 1
      %s91 = scalar_select %p88, %s89, %s90
      %p94 = pneg %p88
      %p95 = scmp.eq.s32.totalorder %s16, 1
      %p96 = por %p94, %p95
      %p97 = scmp.ne.s32.totalorder %s89, %s92
      %p98 = scmp.eq.s32.totalorder %s16, 0
      %p99 = por %p97, %p98
      %p100 = scmp.ne.s32.totalorder %s89, %s92
      %p101 = scmp.eq.s32.totalorder %s21, 1
      %p102 = por %p100, %p101
      %p103 = scmp.ne.s32.totalorder %s92, %s93
      %p104 = scmp.eq.s32.totalorder %s21, 0
      %p105 = por %p103, %p104
      %p106 = scmp.ne.s32.totalorder %s92, %s93
      %p107 = scmp.eq.s32.totalorder %s22, 1
      %p108 = por %p106, %p107
      %p110 = scmp.ne.s32.totalorder %s93, %s109
      %p111 = scmp.eq.s32.totalorder %s22, 0
      %p112 = por %p110, %p111
      %s113 = ssub.s32 %s23, %s35
      %s114 = ssub.s32 %s24, %s31
      %s115 = sor.u32 %s113, %s114
      %p116 = scmp.eq.s32.totalorder %s115, 0
      %s118 = sadd.s32 %s117, 1
      %s119 = scalar_select %p116, %s117, %s118
      %p122 = pneg %p116
      %p123 = scmp.eq.s32.totalorder %s16, 1
      %p124 = por %p122, %p123
      %p125 = scmp.ne.s32.totalorder %s117, %s120
      %p126 = scmp.eq.s32.totalorder %s16, 0
      %p127 = por %p125, %p126
      %p128 = scmp.ne.s32.totalorder %s117, %s120
      %p129 = scmp.eq.s32.totalorder %s21, 1
      %p130 = por %p128, %p129
      %p131 = scmp.ne.s32.totalorder %s120, %s121
      %p132 = scmp.eq.s32.totalorder %s21, 0
      %p133 = por %p131, %p132
      %p134 = scmp.ne.s32.totalorder %s120, %s121
      %p135 = scmp.eq.s32.totalorder %s22, 1
      %p136 = por %p134, %p135
      %p138 = scmp.ne.s32.totalorder %s121, %s137
      %p139 = scmp.eq.s32.totalorder %s22, 0
      %p140 = por %p138, %p139
      %p141 = scmp.le.s32.totalorder 1, %s16
      %p142 = scmp.lt.s32.totalorder %s16, 3
      %p143 = pnand %p141, %p142
      %p144 = pneg %p143
      // Predicated region
      $region9: #{tpu_custom_call.1} parent=5 // pred_check
        _
      $region10: #{tpu_custom_call.1} parent=5 // pred_check_branch
        %146 = sbr.rel (%p143) target = $region12
      $region11: #{tpu_custom_call.1} parent=5 // pred_region
        %s147 = ssub.s32 %s16, 1
        // Predicated region
        $region13: #{tpu_custom_call.1} parent=11 // pred_check
          %p148 = pneg %p77
        $region14: #{tpu_custom_call.1} parent=11 // pred_check_branch
          %150 = sbr.rel (%p148) target = $region16
        $region15: #{tpu_custom_call.1} parent=11 // pred_region
          _
        $region16: #{tpu_custom_call.1} parent=11 // pred_fallthru
          _
      $region12: #{tpu_custom_call.1} parent=5 // pred_fallthru
        _
      %p151 = scmp.lt.s32.totalorder %s16, 2
      // Predicated region
      $region17: #{tpu_custom_call.1} parent=5 // pred_check
        %p152 = pneg %p151
      $region18: #{tpu_custom_call.1} parent=5 // pred_check_branch
        %154 = sbr.rel (%p152) target = $region20
      $region19: #{tpu_custom_call.1} parent=5 // pred_region
        // Predicated region
        $region21: #{tpu_custom_call.1} parent=19 // pred_check
          %p155 = pneg %p50
        $region22: #{tpu_custom_call.1} parent=19 // pred_check_branch
          %157 = sbr.rel (%p155) target = $region24
        $region23: #{tpu_custom_call.1} parent=19 // pred_region
          %s158 = smul.u32 16, %s24
          %p159 = scmp.lt.s32.totalorder %s23, 1
          %s160 = scalar_select %p159, %s23, 1
          %p161 = scmp.lt.s32.totalorder %s158, 15
          %s162 = scalar_select %p161, %s158, 15
          %s163 = smul.addr %s160, 16
          %s164 = sadd.s32 %s162, %s163
          %s165 = smul.addr %s164, 8
          %s166 = scalar_lea.vmem %s0, %s165
          %s167 = smul.u32 16, %s24
        $region24: #{tpu_custom_call.1} parent=19 // pred_fallthru
          _
      $region20: #{tpu_custom_call.1} parent=5 // pred_fallthru
        _
      %p168 = scmp.le.s32.totalorder 1, %s16
      %p169 = scmp.lt.s32.totalorder %s16, 3
      %p170 = pnand %p168, %p169
      %p171 = pneg %p170
      // Predicated region
      $region25: #{tpu_custom_call.1} parent=5 // pred_check
        _
      $region26: #{tpu_custom_call.1} parent=5 // pred_check_branch
        %173 = sbr.rel (%p170) target = $region28
      $region27: #{tpu_custom_call.1} parent=5 // pred_region
        %s174 = ssub.s32 %s16, 1
        %s175 = smul.u32 16, %s26
        %p176 = scmp.lt.s32.totalorder %s25, 1
        %s177 = scalar_select %p176, %s25, 1
        %p178 = scmp.lt.s32.totalorder %s175, 15
        %s179 = scalar_select %p178, %s175, 15
        %s180 = smul.addr %s177, 16
        %s181 = sadd.s32 %s179, %s180
        %s182 = smul.addr %s181, 8
        %s183 = scalar_lea.vmem %s0, %s182
        %p184 = pneg %p56
        %p185 = pneg %p53
        %p186 = pneg %p77
        %p187 = pneg %p74
        %p188 = pneg %p105
        %p189 = pneg %p102
        %s190 = sand.u32 %s92, 1
        %s191 = scalar_lea.sflag [#allocation3], %s190
        %s192 = sand.u32 %s92, 1
        %s193 = smul.addr %s192, 128
        %s194 = scalar_lea.vmem [#allocation2], %s193
        %p195 = pneg %p133
        %p196 = pneg %p130
        %s197 = sand.u32 %s120, 1
        %s198 = scalar_lea.sflag [#allocation5], %s197
        %s199 = sand.u32 %s120, 1
        %s200 = scalar_lea.vmem [#allocation4], %s199
        %s201 = smul.u32 16, %s26
        %p202 = scmp.lt.s32.totalorder %s25, 1
        %s203 = scalar_select %p202, %s25, 1
        %p204 = scmp.lt.s32.totalorder %s201, 15
        %s205 = scalar_select %p204, %s201, 15
        %s206 = smul.addr %s203, 16
        %s207 = sadd.s32 %s205, %s206
        %s208 = smul.addr %s207, 8
        %s209 = scalar_lea.vmem %s0, %s208
        %s210 = smul.u32 16, %s26
        %s211 = smul.u32 16, %s26
        %v212 = vld [vmem:[%s209] sm:$0xff]
        %v213 = vld [vmem:[%s209 + $0x8] sm:$0xff]
        %v214 = vld [vmem:[%s209 + $0x10] sm:$0xff]
        %v215 = vld [vmem:[%s209 + $0x18] sm:$0xff]
        %v216 = vld [vmem:[%s209 + $0x20] sm:$0xff]
        %v217 = vld [vmem:[%s209 + $0x28] sm:$0xff]
        %v218 = vld [vmem:[%s209 + $0x30] sm:$0xff]
        %v219 = vld [vmem:[%s209 + $0x38] sm:$0xff]
        %v220 = vld [vmem:[%s209 + $0x40] sm:$0xff]
        %v221 = vld [vmem:[%s209 + $0x48] sm:$0xff]
        %v222 = vld [vmem:[%s209 + $0x50] sm:$0xff]
        %v223 = vld [vmem:[%s209 + $0x58] sm:$0xff]
        %v224 = vld [vmem:[%s209 + $0x60] sm:$0xff]
        %v225 = vld [vmem:[%s209 + $0x68] sm:$0xff]
        %v226 = vld [vmem:[%s209 + $0x70] sm:$0xff]
        %v227 = vld [vmem:[%s209 + $0x78] sm:$0xff]
        %v228 = vld [vmem:[%s1] sm:$0xff]
        %v229 = vld [vmem:[%s1 + $0x8] sm:$0xff]
        %v230 = vld [vmem:[%s1 + $0x10] sm:$0xff]
        %v231 = vld [vmem:[%s1 + $0x18] sm:$0xff]
        %vm232 = vcmask 261120
        %v234 = vsel %vm232, %v212, 0
        %v237 = vsel %vm232, %v213, 0
        %v240 = vsel %vm232, %v214, 0
        %v243 = vsel %vm232, %v215, 0
        %v246 = vsel %vm232, %v216, 0
        %v249 = vsel %vm232, %v217, 0
        %v252 = vsel %vm232, %v218, 0
        %v255 = vsel %vm232, %v219, 0
        %v258 = vsel %vm232, %v220, 0
        %v261 = vsel %vm232, %v221, 0
        %v264 = vsel %vm232, %v222, 0
        %v267 = vsel %vm232, %v223, 0
        %v270 = vsel %vm232, %v224, 0
        %v273 = vsel %vm232, %v225, 0
        %v276 = vsel %vm232, %v226, 0
        %v279 = vsel %vm232, %v227, 0
        %281 = vmatprep.subr.mxu0 0.0
        %282 = vmatpush1.msra.mxu0 %v228
        %283 = vmatprep.subr.mxu0 0.0
        %284 = vmatpush1.msra.mxu0 %v229
        %285 = vmatprep.subr.mxu0 0.0
        %286 = vmatpush1.msra.mxu0 %v230
        %287 = vmatprep.subr.mxu0 0.0
        %288 = vmatpush1.msra.mxu0 %v231
        %289 = vmatprep.subr.mxu0 0.0
        %290 = vmatpush1.msra.mxu0 0.0
        %291 = vmatprep.subr.mxu0 0.0
        %292 = vmatpush1.msra.mxu0 0.0
        %293 = vmatprep.subr.mxu0 0.0
        %294 = vmatpush1.msra.mxu0 0.0
        %295 = vmatprep.subr.mxu0 0.0
        %296 = vmatpush1.msra.mxu0 0.0
        %297 = vmatprep.subr.mxu0 0.0
        %298 = vmatpush1.msra.mxu0 0.0
        %299 = vmatprep.subr.mxu0 0.0
        %300 = vmatpush1.msra.mxu0 0.0
        %301 = vmatprep.subr.mxu0 0.0
        %302 = vmatpush1.msra.mxu0 0.0
        %303 = vmatprep.subr.mxu0 0.0
        %304 = vmatpush1.msra.mxu0 0.0
        %305 = vmatprep.subr.mxu0 0.0
        %306 = vmatpush1.msra.mxu0 0.0
        %307 = vmatprep.subr.mxu0 0.0
        %308 = vmatpush1.msra.mxu0 0.0
        %309 = vmatprep.subr.mxu0 0.0
        %310 = vmatpush1.msra.mxu0 0.0
        %311 = vmatprep.subr.mxu0 0.0
        %312 = vmatpush1.msra.mxu0 0.0
        %313 = vmatprep.subr.mxu0 0.0
        %314 = vmatpush1.msra.mxu0 0.0
        %315 = vmatprep.subr.mxu0 0.0
        %316 = vmatpush1.msra.mxu0 0.0
        %317 = vmatprep.subr.mxu0 0.0
        %318 = vmatpush1.msra.mxu0 0.0
        %319 = vmatprep.subr.mxu0 0.0
        %320 = vmatpush1.msra.mxu0 0.0
        %321 = vmatprep.subr.mxu0 0.0
        %322 = vmatpush1.msra.mxu0 0.0
        %323 = vmatprep.subr.mxu0 0.0
        %324 = vmatpush1.msra.mxu0 0.0
        %325 = vmatprep.subr.mxu0 0.0
        %326 = vmatpush1.msra.mxu0 0.0
        %327 = vmatprep.subr.mxu0 0.0
        %328 = vmatpush1.msra.mxu0 0.0
        %329 = vmatprep.subr.mxu0 0.0
        %330 = vmatpush1.msra.mxu0 0.0
        %331 = vmatprep.subr.mxu0 0.0
        %332 = vmatpush1.msra.mxu0 0.0
        %333 = vmatprep.subr.mxu0 0.0
        %334 = vmatpush1.msra.mxu0 0.0
        %335 = vmatprep.subr.mxu0 0.0
        %336 = vmatpush1.msra.mxu0 0.0
        %337 = vmatprep.subr.mxu0 0.0
        %338 = vmatpush1.msra.mxu0 0.0
        %339 = vmatprep.subr.mxu0 0.0
        %340 = vmatpush1.msra.mxu0 0.0
        %341 = vmatprep.subr.mxu0 0.0
        %342 = vmatpush1.msra.mxu0 0.0
        %343 = vmatprep.subr.mxu0 0.0
        %344 = vmatpush1.msra.mxu0 0.0
        %345 = vmatprep.mubr.f32.mxu0 0.0
        %346 = vmatmul.mubr.f32.gmra.mrb[0].mxu0 %v234
        %v347 = vpop.f32.mrb[0].mxu0
        %v348 = vadd.f32 0.0, %v347
        %v349 = vpop.f32.mrb[0].mxu0
        %350 = vmatprep.mubr.f32.mxu0 0.0
        %351 = vmatmul.mubr.f32.gmra.mrb[0].mxu0 %v237
        %v352 = vpop.f32.mrb[0].mxu0
        %v353 = vadd.f32 0.0, %v352
        %v354 = vpop.f32.mrb[0].mxu0
        %355 = vmatprep.mubr.f32.mxu0 0.0
        %356 = vmatmul.mubr.f32.gmra.mrb[0].mxu0 %v240
        %v357 = vpop.f32.mrb[0].mxu0
        %v358 = vadd.f32 0.0, %v357
        %v359 = vpop.f32.mrb[0].mxu0
        %360 = vmatprep.mubr.f32.mxu0 0.0
        %361 = vmatmul.mubr.f32.gmra.mrb[0].mxu0 %v243
        %v362 = vpop.f32.mrb[0].mxu0
        %v363 = vadd.f32 0.0, %v362
        %v364 = vpop.f32.mrb[0].mxu0
        %365 = vmatprep.mubr.f32.mxu0 0.0
        %366 = vmatmul.mubr.f32.gmra.mrb[0].mxu0 %v246
        %v367 = vpop.f32.mrb[0].mxu0
        %v368 = vadd.f32 0.0, %v367
        %v369 = vpop.f32.mrb[0].mxu0
        %370 = vmatprep.mubr.f32.mxu0 0.0
        %371 = vmatmul.mubr.f32.gmra.mrb[0].mxu0 %v249
        %v372 = vpop.f32.mrb[0].mxu0
        %v373 = vadd.f32 0.0, %v372
        %v374 = vpop.f32.mrb[0].mxu0
        %375 = vmatprep.mubr.f32.mxu0 0.0
        %376 = vmatmul.mubr.f32.gmra.mrb[0].mxu0 %v252
        %v377 = vpop.f32.mrb[0].mxu0
        %v378 = vadd.f32 0.0, %v377
        %v379 = vpop.f32.mrb[0].mxu0
        %380 = vmatprep.mubr.f32.mxu0 0.0
        %381 = vmatmul.mubr.f32.gmra.mrb[0].mxu0 %v255
        %v382 = vpop.f32.mrb[0].mxu0
        %v383 = vadd.f32 0.0, %v382
        %v384 = vpop.f32.mrb[0].mxu0
        %385 = vmatprep.mubr.f32.mxu0 0.0
        %386 = vmatmul.mubr.f32.gmra.mrb[0].mxu0 %v258
        %v387 = vpop.f32.mrb[0].mxu0
        %v388 = vadd.f32 0.0, %v387
        %v389 = vpop.f32.mrb[0].mxu0
        %390 = vmatprep.mubr.f32.mxu0 0.0
        %391 = vmatmul.mubr.f32.gmra.mrb[0].mxu0 %v261
        %v392 = vpop.f32.mrb[0].mxu0
        %v393 = vadd.f32 0.0, %v392
        %v394 = vpop.f32.mrb[0].mxu0
        %395 = vmatprep.mubr.f32.mxu0 0.0
        %396 = vmatmul.mubr.f32.gmra.mrb[0].mxu0 %v264
        %v397 = vpop.f32.mrb[0].mxu0
        %v398 = vadd.f32 0.0, %v397
        %v399 = vpop.f32.mrb[0].mxu0
        %400 = vmatprep.mubr.f32.mxu0 0.0
        %401 = vmatmul.mubr.f32.gmra.mrb[0].mxu0 %v267
        %v402 = vpop.f32.mrb[0].mxu0
        %v403 = vadd.f32 0.0, %v402
        %v404 = vpop.f32.mrb[0].mxu0
        %405 = vmatprep.mubr.f32.mxu0 0.0
        %406 = vmatmul.mubr.f32.gmra.mrb[0].mxu0 %v270
        %v407 = vpop.f32.mrb[0].mxu0
        %v408 = vadd.f32 0.0, %v407
        %v409 = vpop.f32.mrb[0].mxu0
        %410 = vmatprep.mubr.f32.mxu0 0.0
        %411 = vmatmul.mubr.f32.gmra.mrb[0].mxu0 %v273
        %v412 = vpop.f32.mrb[0].mxu0
        %v413 = vadd.f32 0.0, %v412
        %v414 = vpop.f32.mrb[0].mxu0
        %415 = vmatprep.mubr.f32.mxu0 0.0
        %416 = vmatmul.mubr.f32.gmra.mrb[0].mxu0 %v276
        %v417 = vpop.f32.mrb[0].mxu0
        %v418 = vadd.f32 0.0, %v417
        %v419 = vpop.f32.mrb[0].mxu0
        %420 = vmatprep.mubr.f32.mxu0 0.0
        %421 = vmatmul.mubr.f32.gmra.mrb[0].mxu0 %v279
        %v422 = vpop.f32.mrb[0].mxu0
        %v423 = vadd.f32 0.0, %v422
        %v424 = vpop.f32.mrb[0].mxu0
        %425 = vdwg.mxu0
        %426 = vst [vmem:[%s194] sm:$0xff] %v348
        %427 = vst [vmem:[%s194 + $0x8] sm:$0xff] %v353
        %428 = vst [vmem:[%s194 + $0x10] sm:$0xff] %v358
        %429 = vst [vmem:[%s194 + $0x18] sm:$0xff] %v363
        %430 = vst [vmem:[%s194 + $0x20] sm:$0xff] %v368
        %431 = vst [vmem:[%s194 + $0x28] sm:$0xff] %v373
        %432 = vst [vmem:[%s194 + $0x30] sm:$0xff] %v378
        %433 = vst [vmem:[%s194 + $0x38] sm:$0xff] %v383
        %434 = vst [vmem:[%s194 + $0x40] sm:$0xff] %v388
        %435 = vst [vmem:[%s194 + $0x48] sm:$0xff] %v393
        %436 = vst [vmem:[%s194 + $0x50] sm:$0xff] %v398
        %437 = vst [vmem:[%s194 + $0x58] sm:$0xff] %v403
        %438 = vst [vmem:[%s194 + $0x60] sm:$0xff] %v408
        %439 = vst [vmem:[%s194 + $0x68] sm:$0xff] %v413
        %440 = vst [vmem:[%s194 + $0x70] sm:$0xff] %v418
        %441 = vst [vmem:[%s194 + $0x78] sm:$0xff] %v423
        %v442 = vmul.f32 %v348, %v348
        %v443 = vmul.f32 %v353, %v353
        %v444 = vmul.f32 %v358, %v358
        %v445 = vmul.f32 %v363, %v363
        %v446 = vmul.f32 %v368, %v368
        %v447 = vmul.f32 %v373, %v373
        %v448 = vmul.f32 %v378, %v378
        %v449 = vmul.f32 %v383, %v383
        %v450 = vmul.f32 %v388, %v388
        %v451 = vmul.f32 %v393, %v393
        %v452 = vmul.f32 %v398, %v398
        %v453 = vmul.f32 %v403, %v403
        %v454 = vmul.f32 %v408, %v408
        %v455 = vmul.f32 %v413, %v413
        %v456 = vmul.f32 %v418, %v418
        %v457 = vmul.f32 %v423, %v423
        %458 = vmatprep.subr.mxu0 0.0
        %459 = vmatpush1.xpose.msra.mxu0 %v442
        %460 = vmatprep.subr.mxu0 0.0
        %461 = vmatpush1.xpose.msra.mxu0 %v443
        %462 = vmatprep.subr.mxu0 0.0
        %463 = vmatpush1.xpose.msra.mxu0 %v444
        %464 = vmatprep.subr.mxu0 0.0
        %465 = vmatpush1.xpose.msra.mxu0 %v445
        %466 = vmatprep.subr.mxu0 0.0
        %467 = vmatpush1.xpose.msra.mxu0 %v446
        %468 = vmatprep.subr.mxu0 0.0
        %469 = vmatpush1.xpose.msra.mxu0 %v447
        %470 = vmatprep.subr.mxu0 0.0
        %471 = vmatpush1.xpose.msra.mxu0 %v448
        %472 = vmatprep.subr.mxu0 0.0
        %473 = vmatpush1.xpose.msra.mxu0 %v449
        %474 = vmatprep.subr.mxu0 0.0
        %475 = vmatpush1.xpose.msra.mxu0 %v450
        %476 = vmatprep.subr.mxu0 0.0
        %477 = vmatpush1.xpose.msra.mxu0 %v451
        %478 = vmatprep.subr.mxu0 0.0
        %479 = vmatpush1.xpose.msra.mxu0 %v452
        %480 = vmatprep.subr.mxu0 0.0
        %481 = vmatpush1.xpose.msra.mxu0 %v453
        %482 = vmatprep.subr.mxu0 0.0
        %483 = vmatpush1.xpose.msra.mxu0 %v454
        %484 = vmatprep.subr.mxu0 0.0
        %485 = vmatpush1.xpose.msra.mxu0 %v455
        %486 = vmatprep.subr.mxu0 0.0
        %487 = vmatpush1.xpose.msra.mxu0 %v456
        %488 = vmatprep.subr.mxu0 0.0
        %489 = vmatpush1.xpose.msra.mxu0 %v457
        %490 = vmatprep.subr.mxu0 0.0
        %491 = vmatpush1.xpose.msra.mxu0 0.0
        %492 = vmatprep.subr.mxu0 0.0
        %493 = vmatpush1.xpose.msra.mxu0 0.0
        %494 = vmatprep.subr.mxu0 0.0
        %495 = vmatpush1.xpose.msra.mxu0 0.0
        %496 = vmatprep.subr.mxu0 0.0
        %497 = vmatpush1.xpose.msra.mxu0 0.0
        %498 = vmatprep.subr.mxu0 0.0
        %499 = vmatpush1.xpose.msra.mxu0 0.0
        %500 = vmatprep.subr.mxu0 0.0
        %501 = vmatpush1.xpose.msra.mxu0 0.0
        %502 = vmatprep.subr.mxu0 0.0
        %503 = vmatpush1.xpose.msra.mxu0 0.0
        %504 = vmatprep.subr.mxu0 0.0
        %505 = vmatpush1.xpose.msra.mxu0 0.0
        %506 = vmatprep.subr.mxu0 0.0
        %507 = vmatpush1.xpose.msra.mxu0 0.0
        %508 = vmatprep.subr.mxu0 0.0
        %509 = vmatpush1.xpose.msra.mxu0 0.0
        %510 = vmatprep.subr.mxu0 0.0
        %511 = vmatpush1.xpose.msra.mxu0 0.0
        %512 = vmatprep.subr.mxu0 0.0
        %513 = vmatpush1.xpose.msra.mxu0 0.0
        %514 = vmatprep.subr.mxu0 0.0
        %515 = vmatpush1.xpose.msra.mxu0 0.0
        %516 = vmatprep.subr.mxu0 0.0
        %517 = vmatpush1.xpose.msra.mxu0 0.0
        %518 = vmatprep.subr.mxu0 0.0
        %519 = vmatpush1.xpose.msra.mxu0 0.0
        %520 = vmatprep.subr.mxu0 0.0
        %521 = vmatpush1.xpose.msra.mxu0 0.0
        %522 = vmatprep.mubr.f32.mxu0 0.0
        %523 = vmatmul.mubr.f32.gmra.mrb[0].mxu0 1.0
        %v524 = vpop.f32.mrb[0].mxu0
        %v525 = vadd.f32 0.0, %v524
        %v526 = vpop.f32.mrb[0].mxu0
        %527 = vdwg.mxu0
        %528 = vst [vmem:[%s200] sm:$0x1] %v525
        %s529 = sand.u32 %s92, 1
        %s530 = scalar_lea.sflag [#allocation3], %s529
        %s531 = sand.u32 %s92, 1
        %s532 = smul.addr %s531, 128
        %s533 = scalar_lea.vmem [#allocation2], %s532
        %s534 = sand.u32 %s120, 1
        %s535 = scalar_lea.sflag [#allocation5], %s534
        %s536 = sand.u32 %s120, 1
        %s537 = scalar_lea.vmem [#allocation4], %s536
        // Predicated region
        $region29: #{tpu_custom_call.1} parent=27 // pred_check
          %p538 = pneg %p102
        $region30: #{tpu_custom_call.1} parent=27 // pred_check_branch
          %540 = sbr.rel (%p538) target = $region32
        $region31: #{tpu_custom_call.1} parent=27 // pred_region
          %s541 = smul.u32 16, %s26
          %s543 = ssub.s32 2048, 2048
          %544 = vsyncadd %s530, %s543
          %s545 = smul.addr %s25, 16
          %s546 = sadd.s32 %s541, %s545
          %s547 = smul.addr %s546, 128
          %s548 = scalar_lea.hbm %s2, %s547
          %s549 = sshll.u32 %s533, 4
          %s550 = int_to_ptr.vmem [resolvable:$true] %s549
          %555 = dma.vmem_to_hbm [thread:$0]  %s550, 2048, %s548, %s530, 128, 128, 8
        $region32: #{tpu_custom_call.1} parent=27 // pred_fallthru
          _
        // Predicated region
        $region33: #{tpu_custom_call.1} parent=27 // pred_check
          %p556 = pneg %p130
        $region34: #{tpu_custom_call.1} parent=27 // pred_check_branch
          %558 = sbr.rel (%p556) target = $region36
        $region35: #{tpu_custom_call.1} parent=27 // pred_region
          %s560 = ssub.s32 16, 16
          %561 = vsyncadd %s535, %s560
          %s562 = sadd.s32 %s26, %s25
          %s563 = smul.addr %s562, 16
          %s564 = scalar_lea.hbm %s3, %s563
          %s566 = sshll.u32 %s537, 4
          %s567 = int_to_ptr.vmem [resolvable:$true] %s566
          %569 = dma.vmem_to_hbm [thread:$0]  %s567, 16, %s564, %s535
        $region36: #{tpu_custom_call.1} parent=27 // pred_fallthru
          _
      $region28: #{tpu_custom_call.1} parent=5 // pred_fallthru
        _
      %p570 = scmp.le.s32.totalorder 2, %s16
      // Predicated region
      $region37: #{tpu_custom_call.1} parent=5 // pred_check
        %p571 = pneg %p570
      $region38: #{tpu_custom_call.1} parent=5 // pred_check_branch
        %573 = sbr.rel (%p571) target = $region40
      $region39: #{tpu_custom_call.1} parent=5 // pred_region
        %s574 = ssub.s32 %s16, 2
        // Predicated region
        $region41: #{tpu_custom_call.1} parent=39 // pred_check
          %p575 = pneg %p108
        $region42: #{tpu_custom_call.1} parent=39 // pred_check_branch
          %577 = sbr.rel (%p575) target = $region44
        $region43: #{tpu_custom_call.1} parent=39 // pred_region
          %s578 = sand.u32 %s93, 1
          %s579 = scalar_lea.sflag [#allocation3], %s578
          %s580 = sand.u32 %s93, 1
          %s581 = smul.addr %s580, 128
          %s582 = scalar_lea.vmem [#allocation2], %s581
          %583 = dma.done %s579, 2048
        $region44: #{tpu_custom_call.1} parent=39 // pred_fallthru
          _
        // Predicated region
        $region45: #{tpu_custom_call.1} parent=39 // pred_check
          %p584 = pneg %p136
        $region46: #{tpu_custom_call.1} parent=39 // pred_check_branch
          %586 = sbr.rel (%p584) target = $region48
        $region47: #{tpu_custom_call.1} parent=39 // pred_region
          %s587 = sand.u32 %s121, 1
          %s588 = scalar_lea.sflag [#allocation5], %s587
          %s589 = sand.u32 %s121, 1
          %s590 = scalar_lea.vmem [#allocation4], %s589
          %591 = dma.done %s588, 16
        $region48: #{tpu_custom_call.1} parent=39 // pred_fallthru
          _
      $region40: #{tpu_custom_call.1} parent=5 // pred_fallthru
        _
    $region6: #{tpu_custom_call.1} parent=1 // loop_footer
      %s20 = sadd.s32 1, %s16
    $region7: #{tpu_custom_call.1} parent=1 // loop_footer_branch
      %15 = sbr.rel target = $region3
    $region8: #{tpu_custom_call.1} parent=1 // loop_exit
      _
    %592 = vsyncpa [#allocation3], 1
    %s593 = scalar_lea.sflag [#allocation3], 1
    %594 = vsyncpa %s593, 1
    %595 = vsyncpa [#allocation5], 1
    %s596 = scalar_lea.sflag [#allocation5], 1
    %597 = vsyncpa %s596, 1

</llo_original>
